<compile_context>
chip_gen: v7x
topology: tpu7x:2x2x1
jax: 0.10.0
libtpu: 0.0.40
codegen_flags: <defaults>
</compile_context>

<pallas_src>
import jax
import jax.numpy as jnp
from jax.experimental import pallas as pl
from jax.experimental.pallas import tpu as pltpu


def gru_kernel(gx_ref, h0_ref, whh_ref, bhh_ref, out_ref):
    """Whole-sequence GRU recurrence in one kernel invocation.

    Only the hidden projection (h @ W_hh) remains on the serial critical path;
    the input projection arrives precomputed in gx_ref (b_ih already folded).
    Gate order follows PyTorch: r, z, n with n = tanh(gx_n + r * gh_n).
    """
    T = gx_ref.shape[0]
    H = whh_ref.shape[0]

    # Loaded once, reused every step (VMEM-resident, grid-invariant).
    w_hh = whh_ref[...]          # (H, 3H)
    b_hh = bhh_ref[...]          # (1, 3H)

    def step(t, h):
        gx = gx_ref[t]           # (B, 3H): x_t @ W_ih + b_ih, precomputed
        gh = jnp.dot(h, w_hh, preferred_element_type=jnp.float32) + b_hh
        r = jax.nn.sigmoid(gx[:, 0 * H:1 * H] + gh[:, 0 * H:1 * H])
        z = jax.nn.sigmoid(gx[:, 1 * H:2 * H] + gh[:, 1 * H:2 * H])
        n = jnp.tanh(gx[:, 2 * H:3 * H] + r * gh[:, 2 * H:3 * H])
        h_new = (1.0 - z) * n + z * h
        out_ref[t] = h_new.astype(out_ref.dtype)   # VMEM store; HBM DMA happens once at the end
        return h_new

    # T is small and static: full unroll gives the scheduler the whole
    # dependent chain (no loop-carried register pressure surprises).
    jax.lax.fori_loop(0, T, step, h0_ref[...].astype(jnp.float32), unroll=True)


def gru_pallas(gx, h0, w_hh_t, b_hh):
    """gx: (T,B,3H), h0: (B,H), w_hh_t: (H,3H), b_hh: (1,3H) -> (T,B,H)."""
    T, B, _ = gx.shape
    H = w_hh_t.shape[0]
    vmem = pl.BlockSpec(memory_space=pltpu.MemorySpace.VMEM)
    return pl.pallas_call(
        gru_kernel,
        out_shape=jax.ShapeDtypeStruct((T, B, H), jnp.float32),
        in_specs=[vmem, vmem, vmem, vmem],   # whole arrays, single DMA in
        out_specs=vmem,                      # whole output, single DMA out
    )(gx, h0, w_hh_t, b_hh)


def init_params(key, num_embeddings, embedding_dim, hidden_size):
    """Deterministic synthetic parameters with PyTorch GRU shapes."""
    k0, k1, k2, k3, k4 = jax.random.split(key, 5)
    s = 1.0 / jnp.sqrt(hidden_size)
    return {
        "embedding": jax.random.normal(k0, (num_embeddings, embedding_dim), jnp.float32),
        # PyTorch stores weight_ih_l0 as (3H, E) and weight_hh_l0 as (3H, H);
        # we keep the transposed layouts for right-multiplication on the MXU.
        "w_ih_t": jax.random.uniform(k1, (embedding_dim, 3 * hidden_size), jnp.float32, -s, s),
        "w_hh_t": jax.random.uniform(k2, (hidden_size, 3 * hidden_size), jnp.float32, -s, s),
        "b_ih": jax.random.uniform(k3, (1, 3 * hidden_size), jnp.float32, -s, s),
        "b_hh": jax.random.uniform(k4, (1, 3 * hidden_size), jnp.float32, -s, s),
    }


@jax.jit
def encoder_forward(params, x_tokens, h0):
    """Matches Encoder.forward: (output, hidden) for num_layers=1, unidirectional."""
    B = x_tokens.shape[1]
    H = params["w_hh_t"].shape[0]
    # Fold the embedding lookup and the input projection (incl. b_ih) into a
    # single table gather: Gx_table[tok] == embedding[tok] @ W_ih^T + b_ih.
    # This removes one matmul + bias add per step from the serial recurrence.
    gx_table = params["embedding"] @ params["w_ih_t"] + params["b_ih"]   # (vocab, 3H)
    gx = jnp.take(gx_table, x_tokens, axis=0)                            # (T, B, 3H)

    out = gru_pallas(gx, h0.reshape(B, H), params["w_hh_t"], params["b_hh"])
    hidden = out[-1][None]            # final hidden == last output step
    return out, hidden


def encoder_reference(params, x_tokens, h0):
    """Pure-JAX reference (lax.scan GRU, unfused) for correctness checking."""
    emb = jnp.take(params["embedding"], x_tokens, axis=0)
    H = params["w_hh_t"].shape[0]

    def step(h, x_t):
        gx = x_t @ params["w_ih_t"] + params["b_ih"]
        gh = h @ params["w_hh_t"] + params["b_hh"]
        r = jax.nn.sigmoid(gx[:, :H] + gh[:, :H])
        z = jax.nn.sigmoid(gx[:, H:2 * H] + gh[:, H:2 * H])
        n = jnp.tanh(gx[:, 2 * H:] + r * gh[:, 2 * H:])
        h_new = (1.0 - z) * n + z * h
        return h_new, h_new

    h_last, outs = jax.lax.scan(step, h0.reshape(h0.shape[1], H), emb)
    return outs, h_last[None]


if __name__ == "__main__":
    # Small shapes consistent with the module: seq=8, batch=2, vocab=20, embed=16, hidden=32.
    T, B = 8, 2
    NUM_EMB, EMB_DIM, HIDDEN = 20, 16, 32

    key = jax.random.PRNGKey(0)
    pkey, xkey = jax.random.split(key)
    params = init_params(pkey, NUM_EMB, EMB_DIM, HIDDEN)

    x_tokens = jax.random.randint(xkey, (T, B), 0, NUM_EMB, dtype=jnp.int32)
    h0 = jnp.zeros((1, B, HIDDEN), jnp.float32)   # Encoder.init_hidden

    output, hidden = encoder_forward(params, x_tokens, h0)
    jax.block_until_ready((output, hidden))

    ref_out, ref_hidden = encoder_reference(params, x_tokens, h0)
    assert output.shape == (T, B, HIDDEN) and hidden.shape == (1, B, HIDDEN)
    assert jnp.allclose(output, ref_out, atol=1e-4, rtol=1e-4)
    assert jnp.allclose(hidden, ref_hidden, atol=1e-4, rtol=1e-4)

    print("KERNEL_OK")
</pallas_src>

<mosaic_0001>
module attributes {stable_mosaic.version = 11 : i64} {
  func.func @gru_kernel(%arg0: memref<8x2x96xf32, #tpu.memory_space<vmem>>, %arg1: memref<2x32xf32, #tpu.memory_space<vmem>>, %arg2: memref<32x96xf32, #tpu.memory_space<vmem>>, %arg3: memref<1x96xf32, #tpu.memory_space<vmem>>, %arg4: memref<8x2x32xf32, #tpu.memory_space<vmem>>) attributes {dimension_semantics = [], scalar_prefetch = 0 : i64, scratch_operands = 0 : i64, tpu.core_type = #tpu.core_type<tc>} {
    %c0 = arith.constant 0 : index
    %c0_0 = arith.constant 0 : index
    %0 = vector.load %arg2[%c0, %c0_0] : memref<32x96xf32, #tpu.memory_space<vmem>>, vector<32x96xf32>
    %c0_1 = arith.constant 0 : index
    %c0_2 = arith.constant 0 : index
    %1 = vector.load %arg3[%c0_1, %c0_2] : memref<1x96xf32, #tpu.memory_space<vmem>>, vector<1x96xf32>
    %c0_3 = arith.constant 0 : index
    %c0_4 = arith.constant 0 : index
    %2 = vector.load %arg1[%c0_3, %c0_4] : memref<2x32xf32, #tpu.memory_space<vmem>>, vector<2x32xf32>
    %c0_i32 = arith.constant 0 : i32
    %3 = arith.index_cast %c0_i32 : i32 to index
    %c0_5 = arith.constant 0 : index
    %c0_6 = arith.constant 0 : index
    %4 = vector.load %arg0[%3, %c0_5, %c0_6] : memref<8x2x96xf32, #tpu.memory_space<vmem>>, vector<1x2x96xf32>
    %5 = vector.shape_cast %4 : vector<1x2x96xf32> to vector<2x96xf32>
    %cst = arith.constant dense<0.000000e+00> : vector<2x96xf32>
    %6 = tpu.matmul %2, %0, %cst {dimension_numbers = #tpu.dot_dimension_numbers<[1], [0], [0], [1], [0, 0, 1, 1], [], []>} : vector<2x32xf32>, vector<32x96xf32>, vector<2x96xf32> -> vector<2x96xf32>
    %7 = vector.broadcast %1 : vector<1x96xf32> to vector<2x96xf32>
    %8 = arith.addf %6, %7 : vector<2x96xf32>
    %9 = vector.extract_strided_slice %5 {offsets = [0, 0], sizes = [2, 32], strides = [1, 1]} : vector<2x96xf32> to vector<2x32xf32>
    %10 = vector.extract_strided_slice %8 {offsets = [0, 0], sizes = [2, 32], strides = [1, 1]} : vector<2x96xf32> to vector<2x32xf32>
    %11 = arith.addf %9, %10 : vector<2x32xf32>
    %12 = arith.negf %11 : vector<2x32xf32>
    %13 = math.exp %12 : vector<2x32xf32>
    %cst_7 = arith.constant 1.000000e+00 : f32
    %14 = vector.broadcast %cst_7 : f32 to vector<2x32xf32>
    %15 = arith.addf %14, %13 : vector<2x32xf32>
    %16 = arith.divf %14, %15 : vector<2x32xf32>
    %17 = vector.extract_strided_slice %5 {offsets = [0, 32], sizes = [2, 32], strides = [1, 1]} : vector<2x96xf32> to vector<2x32xf32>
    %18 = vector.extract_strided_slice %8 {offsets = [0, 32], sizes = [2, 32], strides = [1, 1]} : vector<2x96xf32> to vector<2x32xf32>
    %19 = arith.addf %17, %18 : vector<2x32xf32>
    %20 = arith.negf %19 : vector<2x32xf32>
    %21 = math.exp %20 : vector<2x32xf32>
    %cst_8 = arith.constant 1.000000e+00 : f32
    %22 = vector.broadcast %cst_8 : f32 to vector<2x32xf32>
    %23 = arith.addf %22, %21 : vector<2x32xf32>
    %24 = arith.divf %22, %23 : vector<2x32xf32>
    %25 = vector.extract_strided_slice %5 {offsets = [0, 64], sizes = [2, 32], strides = [1, 1]} : vector<2x96xf32> to vector<2x32xf32>
    %26 = vector.extract_strided_slice %8 {offsets = [0, 64], sizes = [2, 32], strides = [1, 1]} : vector<2x96xf32> to vector<2x32xf32>
    %27 = arith.mulf %16, %26 : vector<2x32xf32>
    %28 = arith.addf %25, %27 : vector<2x32xf32>
    %29 = math.tanh %28 : vector<2x32xf32>
    %cst_9 = arith.constant 1.000000e+00 : f32
    %30 = vector.broadcast %cst_9 : f32 to vector<2x32xf32>
    %31 = arith.subf %30, %24 : vector<2x32xf32>
    %32 = arith.mulf %31, %29 : vector<2x32xf32>
    %33 = arith.mulf %24, %2 : vector<2x32xf32>
    %34 = arith.addf %32, %33 : vector<2x32xf32>
    %35 = arith.index_cast %c0_i32 : i32 to index
    %c0_10 = arith.constant 0 : index
    %c0_11 = arith.constant 0 : index
    %36 = vector.load %arg4[%35, %c0_10, %c0_11] : memref<8x2x32xf32, #tpu.memory_space<vmem>>, vector<1x2x32xf32>
    %37 = vector.shape_cast %36 : vector<1x2x32xf32> to vector<2x32xf32>
    %38 = vector.shape_cast %34 : vector<2x32xf32> to vector<1x2x32xf32>
    tpu.vector_store %arg4[%35, %c0_10, %c0_11], %38 {strides = array<i32>} : memref<8x2x32xf32, #tpu.memory_space<vmem>>, vector<1x2x32xf32>,
    %c1_i32 = arith.constant 1 : i32
    %39 = arith.index_cast %c1_i32 : i32 to index
    %c0_12 = arith.constant 0 : index
    %c0_13 = arith.constant 0 : index
    %40 = vector.load %arg0[%39, %c0_12, %c0_13] : memref<8x2x96xf32, #tpu.memory_space<vmem>>, vector<1x2x96xf32>
    %41 = vector.shape_cast %40 : vector<1x2x96xf32> to vector<2x96xf32>
    %cst_14 = arith.constant dense<0.000000e+00> : vector<2x96xf32>
    %42 = tpu.matmul %34, %0, %cst_14 {dimension_numbers = #tpu.dot_dimension_numbers<[1], [0], [0], [1], [0, 0, 1, 1], [], []>} : vector<2x32xf32>, vector<32x96xf32>, vector<2x96xf32> -> vector<2x96xf32>
    %43 = vector.broadcast %1 : vector<1x96xf32> to vector<2x96xf32>
    %44 = arith.addf %42, %43 : vector<2x96xf32>
    %45 = vector.extract_strided_slice %41 {offsets = [0, 0], sizes = [2, 32], strides = [1, 1]} : vector<2x96xf32> to vector<2x32xf32>
    %46 = vector.extract_strided_slice %44 {offsets = [0, 0], sizes = [2, 32], strides = [1, 1]} : vector<2x96xf32> to vector<2x32xf32>
    %47 = arith.addf %45, %46 : vector<2x32xf32>
    %48 = arith.negf %47 : vector<2x32xf32>
    %49 = math.exp %48 : vector<2x32xf32>
    %cst_15 = arith.constant 1.000000e+00 : f32
    %50 = vector.broadcast %cst_15 : f32 to vector<2x32xf32>
    %51 = arith.addf %50, %49 : vector<2x32xf32>
    %52 = arith.divf %50, %51 : vector<2x32xf32>
    %53 = vector.extract_strided_slice %41 {offsets = [0, 32], sizes = [2, 32], strides = [1, 1]} : vector<2x96xf32> to vector<2x32xf32>
    %54 = vector.extract_strided_slice %44 {offsets = [0, 32], sizes = [2, 32], strides = [1, 1]} : vector<2x96xf32> to vector<2x32xf32>
    %55 = arith.addf %53, %54 : vector<2x32xf32>
    %56 = arith.negf %55 : vector<2x32xf32>
    %57 = math.exp %56 : vector<2x32xf32>
    %cst_16 = arith.constant 1.000000e+00 : f32
    %58 = vector.broadcast %cst_16 : f32 to vector<2x32xf32>
    %59 = arith.addf %58, %57 : vector<2x32xf32>
    %60 = arith.divf %58, %59 : vector<2x32xf32>
    %61 = vector.extract_strided_slice %41 {offsets = [0, 64], sizes = [2, 32], strides = [1, 1]} : vector<2x96xf32> to vector<2x32xf32>
    %62 = vector.extract_strided_slice %44 {offsets = [0, 64], sizes = [2, 32], strides = [1, 1]} : vector<2x96xf32> to vector<2x32xf32>
    %63 = arith.mulf %52, %62 : vector<2x32xf32>
    %64 = arith.addf %61, %63 : vector<2x32xf32>
    %65 = math.tanh %64 : vector<2x32xf32>
    %cst_17 = arith.constant 1.000000e+00 : f32
    %66 = vector.broadcast %cst_17 : f32 to vector<2x32xf32>
    %67 = arith.subf %66, %60 : vector<2x32xf32>
    %68 = arith.mulf %67, %65 : vector<2x32xf32>
    %69 = arith.mulf %60, %34 : vector<2x32xf32>
    %70 = arith.addf %68, %69 : vector<2x32xf32>
    %71 = arith.index_cast %c1_i32 : i32 to index
    %c0_18 = arith.constant 0 : index
    %c0_19 = arith.constant 0 : index
    %72 = vector.load %arg4[%71, %c0_18, %c0_19] : memref<8x2x32xf32, #tpu.memory_space<vmem>>, vector<1x2x32xf32>
    %73 = vector.shape_cast %72 : vector<1x2x32xf32> to vector<2x32xf32>
    %74 = vector.shape_cast %70 : vector<2x32xf32> to vector<1x2x32xf32>
    tpu.vector_store %arg4[%71, %c0_18, %c0_19], %74 {strides = array<i32>} : memref<8x2x32xf32, #tpu.memory_space<vmem>>, vector<1x2x32xf32>,
    %c2_i32 = arith.constant 2 : i32
    %75 = arith.index_cast %c2_i32 : i32 to index
    %c0_20 = arith.constant 0 : index
    %c0_21 = arith.constant 0 : index
    %76 = vector.load %arg0[%75, %c0_20, %c0_21] : memref<8x2x96xf32, #tpu.memory_space<vmem>>, vector<1x2x96xf32>
    %77 = vector.shape_cast %76 : vector<1x2x96xf32> to vector<2x96xf32>
    %cst_22 = arith.constant dense<0.000000e+00> : vector<2x96xf32>
    %78 = tpu.matmul %70, %0, %cst_22 {dimension_numbers = #tpu.dot_dimension_numbers<[1], [0], [0], [1], [0, 0, 1, 1], [], []>} : vector<2x32xf32>, vector<32x96xf32>, vector<2x96xf32> -> vector<2x96xf32>
    %79 = vector.broadcast %1 : vector<1x96xf32> to vector<2x96xf32>
    %80 = arith.addf %78, %79 : vector<2x96xf32>
    %81 = vector.extract_strided_slice %77 {offsets = [0, 0], sizes = [2, 32], strides = [1, 1]} : vector<2x96xf32> to vector<2x32xf32>
    %82 = vector.extract_strided_slice %80 {offsets = [0, 0], sizes = [2, 32], strides = [1, 1]} : vector<2x96xf32> to vector<2x32xf32>
    %83 = arith.addf %81, %82 : vector<2x32xf32>
    %84 = arith.negf %83 : vector<2x32xf32>
    %85 = math.exp %84 : vector<2x32xf32>
    %cst_23 = arith.constant 1.000000e+00 : f32
    %86 = vector.broadcast %cst_23 : f32 to vector<2x32xf32>
    %87 = arith.addf %86, %85 : vector<2x32xf32>
    %88 = arith.divf %86, %87 : vector<2x32xf32>
    %89 = vector.extract_strided_slice %77 {offsets = [0, 32], sizes = [2, 32], strides = [1, 1]} : vector<2x96xf32> to vector<2x32xf32>
    %90 = vector.extract_strided_slice %80 {offsets = [0, 32], sizes = [2, 32], strides = [1, 1]} : vector<2x96xf32> to vector<2x32xf32>
    %91 = arith.addf %89, %90 : vector<2x32xf32>
    %92 = arith.negf %91 : vector<2x32xf32>
    %93 = math.exp %92 : vector<2x32xf32>
    %cst_24 = arith.constant 1.000000e+00 : f32
    %94 = vector.broadcast %cst_24 : f32 to vector<2x32xf32>
    %95 = arith.addf %94, %93 : vector<2x32xf32>
    %96 = arith.divf %94, %95 : vector<2x32xf32>
    %97 = vector.extract_strided_slice %77 {offsets = [0, 64], sizes = [2, 32], strides = [1, 1]} : vector<2x96xf32> to vector<2x32xf32>
    %98 = vector.extract_strided_slice %80 {offsets = [0, 64], sizes = [2, 32], strides = [1, 1]} : vector<2x96xf32> to vector<2x32xf32>
    %99 = arith.mulf %88, %98 : vector<2x32xf32>
    %100 = arith.addf %97, %99 : vector<2x32xf32>
    %101 = math.tanh %100 : vector<2x32xf32>
    %cst_25 = arith.constant 1.000000e+00 : f32
    %102 = vector.broadcast %cst_25 : f32 to vector<2x32xf32>
    %103 = arith.subf %102, %96 : vector<2x32xf32>
    %104 = arith.mulf %103, %101 : vector<2x32xf32>
    %105 = arith.mulf %96, %70 : vector<2x32xf32>
    %106 = arith.addf %104, %105 : vector<2x32xf32>
    %107 = arith.index_cast %c2_i32 : i32 to index
    %c0_26 = arith.constant 0 : index
    %c0_27 = arith.constant 0 : index
    %108 = vector.load %arg4[%107, %c0_26, %c0_27] : memref<8x2x32xf32, #tpu.memory_space<vmem>>, vector<1x2x32xf32>
    %109 = vector.shape_cast %108 : vector<1x2x32xf32> to vector<2x32xf32>
    %110 = vector.shape_cast %106 : vector<2x32xf32> to vector<1x2x32xf32>
    tpu.vector_store %arg4[%107, %c0_26, %c0_27], %110 {strides = array<i32>} : memref<8x2x32xf32, #tpu.memory_space<vmem>>, vector<1x2x32xf32>,
    %c3_i32 = arith.constant 3 : i32
    %111 = arith.index_cast %c3_i32 : i32 to index
    %c0_28 = arith.constant 0 : index
    %c0_29 = arith.constant 0 : index
    %112 = vector.load %arg0[%111, %c0_28, %c0_29] : memref<8x2x96xf32, #tpu.memory_space<vmem>>, vector<1x2x96xf32>
    %113 = vector.shape_cast %112 : vector<1x2x96xf32> to vector<2x96xf32>
    %cst_30 = arith.constant dense<0.000000e+00> : vector<2x96xf32>
    %114 = tpu.matmul %106, %0, %cst_30 {dimension_numbers = #tpu.dot_dimension_numbers<[1], [0], [0], [1], [0, 0, 1, 1], [], []>} : vector<2x32xf32>, vector<32x96xf32>, vector<2x96xf32> -> vector<2x96xf32>
    %115 = vector.broadcast %1 : vector<1x96xf32> to vector<2x96xf32>
    %116 = arith.addf %114, %115 : vector<2x96xf32>
    %117 = vector.extract_strided_slice %113 {offsets = [0, 0], sizes = [2, 32], strides = [1, 1]} : vector<2x96xf32> to vector<2x32xf32>
    %118 = vector.extract_strided_slice %116 {offsets = [0, 0], sizes = [2, 32], strides = [1, 1]} : vector<2x96xf32> to vector<2x32xf32>
    %119 = arith.addf %117, %118 : vector<2x32xf32>
    %120 = arith.negf %119 : vector<2x32xf32>
    %121 = math.exp %120 : vector<2x32xf32>
    %cst_31 = arith.constant 1.000000e+00 : f32
    %122 = vector.broadcast %cst_31 : f32 to vector<2x32xf32>
    %123 = arith.addf %122, %121 : vector<2x32xf32>
    %124 = arith.divf %122, %123 : vector<2x32xf32>
    %125 = vector.extract_strided_slice %113 {offsets = [0, 32], sizes = [2, 32], strides = [1, 1]} : vector<2x96xf32> to vector<2x32xf32>
    %126 = vector.extract_strided_slice %116 {offsets = [0, 32], sizes = [2, 32], strides = [1, 1]} : vector<2x96xf32> to vector<2x32xf32>
    %127 = arith.addf %125, %126 : vector<2x32xf32>
    %128 = arith.negf %127 : vector<2x32xf32>
    %129 = math.exp %128 : vector<2x32xf32>
    %cst_32 = arith.constant 1.000000e+00 : f32
    %130 = vector.broadcast %cst_32 : f32 to vector<2x32xf32>
    %131 = arith.addf %130, %129 : vector<2x32xf32>
    %132 = arith.divf %130, %131 : vector<2x32xf32>
    %133 = vector.extract_strided_slice %113 {offsets = [0, 64], sizes = [2, 32], strides = [1, 1]} : vector<2x96xf32> to vector<2x32xf32>
    %134 = vector.extract_strided_slice %116 {offsets = [0, 64], sizes = [2, 32], strides = [1, 1]} : vector<2x96xf32> to vector<2x32xf32>
    %135 = arith.mulf %124, %134 : vector<2x32xf32>
    %136 = arith.addf %133, %135 : vector<2x32xf32>
    %137 = math.tanh %136 : vector<2x32xf32>
    %cst_33 = arith.constant 1.000000e+00 : f32
    %138 = vector.broadcast %cst_33 : f32 to vector<2x32xf32>
    %139 = arith.subf %138, %132 : vector<2x32xf32>
    %140 = arith.mulf %139, %137 : vector<2x32xf32>
    %141 = arith.mulf %132, %106 : vector<2x32xf32>
    %142 = arith.addf %140, %141 : vector<2x32xf32>
    %143 = arith.index_cast %c3_i32 : i32 to index
    %c0_34 = arith.constant 0 : index
    %c0_35 = arith.constant 0 : index
    %144 = vector.load %arg4[%143, %c0_34, %c0_35] : memref<8x2x32xf32, #tpu.memory_space<vmem>>, vector<1x2x32xf32>
    %145 = vector.shape_cast %144 : vector<1x2x32xf32> to vector<2x32xf32>
    %146 = vector.shape_cast %142 : vector<2x32xf32> to vector<1x2x32xf32>
    tpu.vector_store %arg4[%143, %c0_34, %c0_35], %146 {strides = array<i32>} : memref<8x2x32xf32, #tpu.memory_space<vmem>>, vector<1x2x32xf32>,
    %c4_i32 = arith.constant 4 : i32
    %147 = arith.index_cast %c4_i32 : i32 to index
    %c0_36 = arith.constant 0 : index
    %c0_37 = arith.constant 0 : index
    %148 = vector.load %arg0[%147, %c0_36, %c0_37] : memref<8x2x96xf32, #tpu.memory_space<vmem>>, vector<1x2x96xf32>
    %149 = vector.shape_cast %148 : vector<1x2x96xf32> to vector<2x96xf32>
    %cst_38 = arith.constant dense<0.000000e+00> : vector<2x96xf32>
    %150 = tpu.matmul %142, %0, %cst_38 {dimension_numbers = #tpu.dot_dimension_numbers<[1], [0], [0], [1], [0, 0, 1, 1], [], []>} : vector<2x32xf32>, vector<32x96xf32>, vector<2x96xf32> -> vector<2x96xf32>
    %151 = vector.broadcast %1 : vector<1x96xf32> to vector<2x96xf32>
    %152 = arith.addf %150, %151 : vector<2x96xf32>
    %153 = vector.extract_strided_slice %149 {offsets = [0, 0], sizes = [2, 32], strides = [1, 1]} : vector<2x96xf32> to vector<2x32xf32>
    %154 = vector.extract_strided_slice %152 {offsets = [0, 0], sizes = [2, 32], strides = [1, 1]} : vector<2x96xf32> to vector<2x32xf32>
    %155 = arith.addf %153, %154 : vector<2x32xf32>
    %156 = arith.negf %155 : vector<2x32xf32>
    %157 = math.exp %156 : vector<2x32xf32>
    %cst_39 = arith.constant 1.000000e+00 : f32
    %158 = vector.broadcast %cst_39 : f32 to vector<2x32xf32>
    %159 = arith.addf %158, %157 : vector<2x32xf32>
    %160 = arith.divf %158, %159 : vector<2x32xf32>
    %161 = vector.extract_strided_slice %149 {offsets = [0, 32], sizes = [2, 32], strides = [1, 1]} : vector<2x96xf32> to vector<2x32xf32>
    %162 = vector.extract_strided_slice %152 {offsets = [0, 32], sizes = [2, 32], strides = [1, 1]} : vector<2x96xf32> to vector<2x32xf32>
    %163 = arith.addf %161, %162 : vector<2x32xf32>
    %164 = arith.negf %163 : vector<2x32xf32>
    %165 = math.exp %164 : vector<2x32xf32>
    %cst_40 = arith.constant 1.000000e+00 : f32
    %166 = vector.broadcast %cst_40 : f32 to vector<2x32xf32>
    %167 = arith.addf %166, %165 : vector<2x32xf32>
    %168 = arith.divf %166, %167 : vector<2x32xf32>
    %169 = vector.extract_strided_slice %149 {offsets = [0, 64], sizes = [2, 32], strides = [1, 1]} : vector<2x96xf32> to vector<2x32xf32>
    %170 = vector.extract_strided_slice %152 {offsets = [0, 64], sizes = [2, 32], strides = [1, 1]} : vector<2x96xf32> to vector<2x32xf32>
    %171 = arith.mulf %160, %170 : vector<2x32xf32>
    %172 = arith.addf %169, %171 : vector<2x32xf32>
    %173 = math.tanh %172 : vector<2x32xf32>
    %cst_41 = arith.constant 1.000000e+00 : f32
    %174 = vector.broadcast %cst_41 : f32 to vector<2x32xf32>
    %175 = arith.subf %174, %168 : vector<2x32xf32>
    %176 = arith.mulf %175, %173 : vector<2x32xf32>
    %177 = arith.mulf %168, %142 : vector<2x32xf32>
    %178 = arith.addf %176, %177 : vector<2x32xf32>
    %179 = arith.index_cast %c4_i32 : i32 to index
    %c0_42 = arith.constant 0 : index
    %c0_43 = arith.constant 0 : index
    %180 = vector.load %arg4[%179, %c0_42, %c0_43] : memref<8x2x32xf32, #tpu.memory_space<vmem>>, vector<1x2x32xf32>
    %181 = vector.shape_cast %180 : vector<1x2x32xf32> to vector<2x32xf32>
    %182 = vector.shape_cast %178 : vector<2x32xf32> to vector<1x2x32xf32>
    tpu.vector_store %arg4[%179, %c0_42, %c0_43], %182 {strides = array<i32>} : memref<8x2x32xf32, #tpu.memory_space<vmem>>, vector<1x2x32xf32>,
    %c5_i32 = arith.constant 5 : i32
    %183 = arith.index_cast %c5_i32 : i32 to index
    %c0_44 = arith.constant 0 : index
    %c0_45 = arith.constant 0 : index
    %184 = vector.load %arg0[%183, %c0_44, %c0_45] : memref<8x2x96xf32, #tpu.memory_space<vmem>>, vector<1x2x96xf32>
    %185 = vector.shape_cast %184 : vector<1x2x96xf32> to vector<2x96xf32>
    %cst_46 = arith.constant dense<0.000000e+00> : vector<2x96xf32>
    %186 = tpu.matmul %178, %0, %cst_46 {dimension_numbers = #tpu.dot_dimension_numbers<[1], [0], [0], [1], [0, 0, 1, 1], [], []>} : vector<2x32xf32>, vector<32x96xf32>, vector<2x96xf32> -> vector<2x96xf32>
    %187 = vector.broadcast %1 : vector<1x96xf32> to vector<2x96xf32>
    %188 = arith.addf %186, %187 : vector<2x96xf32>
    %189 = vector.extract_strided_slice %185 {offsets = [0, 0], sizes = [2, 32], strides = [1, 1]} : vector<2x96xf32> to vector<2x32xf32>
    %190 = vector.extract_strided_slice %188 {offsets = [0, 0], sizes = [2, 32], strides = [1, 1]} : vector<2x96xf32> to vector<2x32xf32>
    %191 = arith.addf %189, %190 : vector<2x32xf32>
    %192 = arith.negf %191 : vector<2x32xf32>
    %193 = math.exp %192 : vector<2x32xf32>
    %cst_47 = arith.constant 1.000000e+00 : f32
    %194 = vector.broadcast %cst_47 : f32 to vector<2x32xf32>
    %195 = arith.addf %194, %193 : vector<2x32xf32>
    %196 = arith.divf %194, %195 : vector<2x32xf32>
    %197 = vector.extract_strided_slice %185 {offsets = [0, 32], sizes = [2, 32], strides = [1, 1]} : vector<2x96xf32> to vector<2x32xf32>
    %198 = vector.extract_strided_slice %188 {offsets = [0, 32], sizes = [2, 32], strides = [1, 1]} : vector<2x96xf32> to vector<2x32xf32>
    %199 = arith.addf %197, %198 : vector<2x32xf32>
    %200 = arith.negf %199 : vector<2x32xf32>
    %201 = math.exp %200 : vector<2x32xf32>
    %cst_48 = arith.constant 1.000000e+00 : f32
    %202 = vector.broadcast %cst_48 : f32 to vector<2x32xf32>
    %203 = arith.addf %202, %201 : vector<2x32xf32>
    %204 = arith.divf %202, %203 : vector<2x32xf32>
    %205 = vector.extract_strided_slice %185 {offsets = [0, 64], sizes = [2, 32], strides = [1, 1]} : vector<2x96xf32> to vector<2x32xf32>
    %206 = vector.extract_strided_slice %188 {offsets = [0, 64], sizes = [2, 32], strides = [1, 1]} : vector<2x96xf32> to vector<2x32xf32>
    %207 = arith.mulf %196, %206 : vector<2x32xf32>
    %208 = arith.addf %205, %207 : vector<2x32xf32>
    %209 = math.tanh %208 : vector<2x32xf32>
    %cst_49 = arith.constant 1.000000e+00 : f32
    %210 = vector.broadcast %cst_49 : f32 to vector<2x32xf32>
    %211 = arith.subf %210, %204 : vector<2x32xf32>
    %212 = arith.mulf %211, %209 : vector<2x32xf32>
    %213 = arith.mulf %204, %178 : vector<2x32xf32>
    %214 = arith.addf %212, %213 : vector<2x32xf32>
    %215 = arith.index_cast %c5_i32 : i32 to index
    %c0_50 = arith.constant 0 : index
    %c0_51 = arith.constant 0 : index
    %216 = vector.load %arg4[%215, %c0_50, %c0_51] : memref<8x2x32xf32, #tpu.memory_space<vmem>>, vector<1x2x32xf32>
    %217 = vector.shape_cast %216 : vector<1x2x32xf32> to vector<2x32xf32>
    %218 = vector.shape_cast %214 : vector<2x32xf32> to vector<1x2x32xf32>
    tpu.vector_store %arg4[%215, %c0_50, %c0_51], %218 {strides = array<i32>} : memref<8x2x32xf32, #tpu.memory_space<vmem>>, vector<1x2x32xf32>,
    %c6_i32 = arith.constant 6 : i32
    %219 = arith.index_cast %c6_i32 : i32 to index
    %c0_52 = arith.constant 0 : index
    %c0_53 = arith.constant 0 : index
    %220 = vector.load %arg0[%219, %c0_52, %c0_53] : memref<8x2x96xf32, #tpu.memory_space<vmem>>, vector<1x2x96xf32>
    %221 = vector.shape_cast %220 : vector<1x2x96xf32> to vector<2x96xf32>
    %cst_54 = arith.constant dense<0.000000e+00> : vector<2x96xf32>
    %222 = tpu.matmul %214, %0, %cst_54 {dimension_numbers = #tpu.dot_dimension_numbers<[1], [0], [0], [1], [0, 0, 1, 1], [], []>} : vector<2x32xf32>, vector<32x96xf32>, vector<2x96xf32> -> vector<2x96xf32>
    %223 = vector.broadcast %1 : vector<1x96xf32> to vector<2x96xf32>
    %224 = arith.addf %222, %223 : vector<2x96xf32>
    %225 = vector.extract_strided_slice %221 {offsets = [0, 0], sizes = [2, 32], strides = [1, 1]} : vector<2x96xf32> to vector<2x32xf32>
    %226 = vector.extract_strided_slice %224 {offsets = [0, 0], sizes = [2, 32], strides = [1, 1]} : vector<2x96xf32> to vector<2x32xf32>
    %227 = arith.addf %225, %226 : vector<2x32xf32>
    %228 = arith.negf %227 : vector<2x32xf32>
    %229 = math.exp %228 : vector<2x32xf32>
    %cst_55 = arith.constant 1.000000e+00 : f32
    %230 = vector.broadcast %cst_55 : f32 to vector<2x32xf32>
    %231 = arith.addf %230, %229 : vector<2x32xf32>
    %232 = arith.divf %230, %231 : vector<2x32xf32>
    %233 = vector.extract_strided_slice %221 {offsets = [0, 32], sizes = [2, 32], strides = [1, 1]} : vector<2x96xf32> to vector<2x32xf32>
    %234 = vector.extract_strided_slice %224 {offsets = [0, 32], sizes = [2, 32], strides = [1, 1]} : vector<2x96xf32> to vector<2x32xf32>
    %235 = arith.addf %233, %234 : vector<2x32xf32>
    %236 = arith.negf %235 : vector<2x32xf32>
    %237 = math.exp %236 : vector<2x32xf32>
    %cst_56 = arith.constant 1.000000e+00 : f32
    %238 = vector.broadcast %cst_56 : f32 to vector<2x32xf32>
    %239 = arith.addf %238, %237 : vector<2x32xf32>
    %240 = arith.divf %238, %239 : vector<2x32xf32>
    %241 = vector.extract_strided_slice %221 {offsets = [0, 64], sizes = [2, 32], strides = [1, 1]} : vector<2x96xf32> to vector<2x32xf32>
    %242 = vector.extract_strided_slice %224 {offsets = [0, 64], sizes = [2, 32], strides = [1, 1]} : vector<2x96xf32> to vector<2x32xf32>
    %243 = arith.mulf %232, %242 : vector<2x32xf32>
    %244 = arith.addf %241, %243 : vector<2x32xf32>
    %245 = math.tanh %244 : vector<2x32xf32>
    %cst_57 = arith.constant 1.000000e+00 : f32
    %246 = vector.broadcast %cst_57 : f32 to vector<2x32xf32>
    %247 = arith.subf %246, %240 : vector<2x32xf32>
    %248 = arith.mulf %247, %245 : vector<2x32xf32>
    %249 = arith.mulf %240, %214 : vector<2x32xf32>
    %250 = arith.addf %248, %249 : vector<2x32xf32>
    %251 = arith.index_cast %c6_i32 : i32 to index
    %c0_58 = arith.constant 0 : index
    %c0_59 = arith.constant 0 : index
    %252 = vector.load %arg4[%251, %c0_58, %c0_59] : memref<8x2x32xf32, #tpu.memory_space<vmem>>, vector<1x2x32xf32>
    %253 = vector.shape_cast %252 : vector<1x2x32xf32> to vector<2x32xf32>
    %254 = vector.shape_cast %250 : vector<2x32xf32> to vector<1x2x32xf32>
    tpu.vector_store %arg4[%251, %c0_58, %c0_59], %254 {strides = array<i32>} : memref<8x2x32xf32, #tpu.memory_space<vmem>>, vector<1x2x32xf32>,
    %c7_i32 = arith.constant 7 : i32
    %255 = arith.index_cast %c7_i32 : i32 to index
    %c0_60 = arith.constant 0 : index
    %c0_61 = arith.constant 0 : index
    %256 = vector.load %arg0[%255, %c0_60, %c0_61] : memref<8x2x96xf32, #tpu.memory_space<vmem>>, vector<1x2x96xf32>
    %257 = vector.shape_cast %256 : vector<1x2x96xf32> to vector<2x96xf32>
    %cst_62 = arith.constant dense<0.000000e+00> : vector<2x96xf32>
    %258 = tpu.matmul %250, %0, %cst_62 {dimension_numbers = #tpu.dot_dimension_numbers<[1], [0], [0], [1], [0, 0, 1, 1], [], []>} : vector<2x32xf32>, vector<32x96xf32>, vector<2x96xf32> -> vector<2x96xf32>
    %259 = vector.broadcast %1 : vector<1x96xf32> to vector<2x96xf32>
    %260 = arith.addf %258, %259 : vector<2x96xf32>
    %261 = vector.extract_strided_slice %257 {offsets = [0, 0], sizes = [2, 32], strides = [1, 1]} : vector<2x96xf32> to vector<2x32xf32>
    %262 = vector.extract_strided_slice %260 {offsets = [0, 0], sizes = [2, 32], strides = [1, 1]} : vector<2x96xf32> to vector<2x32xf32>
    %263 = arith.addf %261, %262 : vector<2x32xf32>
    %264 = arith.negf %263 : vector<2x32xf32>
    %265 = math.exp %264 : vector<2x32xf32>
    %cst_63 = arith.constant 1.000000e+00 : f32
    %266 = vector.broadcast %cst_63 : f32 to vector<2x32xf32>
    %267 = arith.addf %266, %265 : vector<2x32xf32>
    %268 = arith.divf %266, %267 : vector<2x32xf32>
    %269 = vector.extract_strided_slice %257 {offsets = [0, 32], sizes = [2, 32], strides = [1, 1]} : vector<2x96xf32> to vector<2x32xf32>
    %270 = vector.extract_strided_slice %260 {offsets = [0, 32], sizes = [2, 32], strides = [1, 1]} : vector<2x96xf32> to vector<2x32xf32>
    %271 = arith.addf %269, %270 : vector<2x32xf32>
    %272 = arith.negf %271 : vector<2x32xf32>
    %273 = math.exp %272 : vector<2x32xf32>
    %cst_64 = arith.constant 1.000000e+00 : f32
    %274 = vector.broadcast %cst_64 : f32 to vector<2x32xf32>
    %275 = arith.addf %274, %273 : vector<2x32xf32>
    %276 = arith.divf %274, %275 : vector<2x32xf32>
    %277 = vector.extract_strided_slice %257 {offsets = [0, 64], sizes = [2, 32], strides = [1, 1]} : vector<2x96xf32> to vector<2x32xf32>
    %278 = vector.extract_strided_slice %260 {offsets = [0, 64], sizes = [2, 32], strides = [1, 1]} : vector<2x96xf32> to vector<2x32xf32>
    %279 = arith.mulf %268, %278 : vector<2x32xf32>
    %280 = arith.addf %277, %279 : vector<2x32xf32>
    %281 = math.tanh %280 : vector<2x32xf32>
    %cst_65 = arith.constant 1.000000e+00 : f32
    %282 = vector.broadcast %cst_65 : f32 to vector<2x32xf32>
    %283 = arith.subf %282, %276 : vector<2x32xf32>
    %284 = arith.mulf %283, %281 : vector<2x32xf32>
    %285 = arith.mulf %276, %250 : vector<2x32xf32>
    %286 = arith.addf %284, %285 : vector<2x32xf32>
    %287 = arith.index_cast %c7_i32 : i32 to index
    %c0_66 = arith.constant 0 : index
    %c0_67 = arith.constant 0 : index
    %288 = vector.load %arg4[%287, %c0_66, %c0_67] : memref<8x2x32xf32, #tpu.memory_space<vmem>>, vector<1x2x32xf32>
    %289 = vector.shape_cast %288 : vector<1x2x32xf32> to vector<2x32xf32>
    %290 = vector.shape_cast %286 : vector<2x32xf32> to vector<1x2x32xf32>
    tpu.vector_store %arg4[%287, %c0_66, %c0_67], %290 {strides = array<i32>} : memref<8x2x32xf32, #tpu.memory_space<vmem>>, vector<1x2x32xf32>,
    %c8_i32 = arith.constant 8 : i32
    return
  }
}

</mosaic_0001>

<llo_original>
// kernel: encoder_forward.1
$region0: #{encoder_forward.1}
  #allocation0 [shape = 'u32[]', space=smem, size = 0x4, offset = 0x4, fixed_abs, tag = 'smem constant byte address 0x4 - core index']
  #allocation1 [shape = 'u32[144,128]{1,0:T(1,128)}', space=vmem, size = 0x12000, scoped, tag = 'internal scratch']
  %s0 = inlined_call_operand.vmem [shape: f32[8,2,96], index: 0, kind: input, shape index: {}]
  %s1 = inlined_call_operand.vmem [shape: f32[2,32], index: 1, kind: input, shape index: {}]
  %s2 = inlined_call_operand.vmem [shape: f32[32,96], index: 2, kind: input, shape index: {}]
  %s3 = inlined_call_operand.vmem [shape: f32[1,96], index: 3, kind: input, shape index: {}]
  %s4 = inlined_call_operand.vmem [shape: f32[8,2,32], index: 4, kind: output, shape index: {}]
  %s5 = sld [smem:[#allocation0]]
  $region26: #{encoder_forward.1} parent=0
    _
  %s7 = ssub.s32 1, %s5
  %s8 = scalar_select 0, %s7, %s5
  // Predicated region
  $region2: #{encoder_forward.1} parent=0 // pred_check
    _
  $region3: #{encoder_forward.1} parent=0 // pred_check_branch
    %10 = sbr.rel (0) target = $region5
  $region4: #{encoder_forward.1} parent=0 // pred_region
    _
  $region5: #{encoder_forward.1} parent=0 // pred_fallthru
    _
  // Predicated region
  $region6: #{encoder_forward.1} parent=0 // pred_check
    _
  $region7: #{encoder_forward.1} parent=0 // pred_check_branch
    %12 = sbr.rel (0) target = $region9
  $region8: #{encoder_forward.1} parent=0 // pred_region
    _
  $region9: #{encoder_forward.1} parent=0 // pred_fallthru
    _
  // Predicated region
  $region10: #{encoder_forward.1} parent=0 // pred_check
    _
  $region11: #{encoder_forward.1} parent=0 // pred_check_branch
    %14 = sbr.rel (0) target = $region13
  $region12: #{encoder_forward.1} parent=0 // pred_region
    _
  $region13: #{encoder_forward.1} parent=0 // pred_fallthru
    _
  // Predicated region
  $region14: #{encoder_forward.1} parent=0 // pred_check
    _
  $region15: #{encoder_forward.1} parent=0 // pred_check_branch
    %16 = sbr.rel (0) target = $region17
  $region16: #{encoder_forward.1} parent=0 // pred_region
    _
  $region17: #{encoder_forward.1} parent=0 // pred_fallthru
    _
  %v17 = vld [vmem:[%s2] sm:$0xff]
  %v18 = vld [vmem:[%s2 + $0x8] sm:$0xff]
  %v19 = vld [vmem:[%s2 + $0x10] sm:$0xff]
  %v20 = vld [vmem:[%s2 + $0x18] sm:$0xff]
  %v21 = vld [vmem:[%s3] sm:$0x1]
  %v22 = vld [vmem:[%s1] sm:$0x3]
  %v23 = vld [vmem:[%s0] sm:$0x3]
  %v25 = vlaneseq
  %v26 = vshrl.u32 %v25, 7
  %v27 = vsub.s32 0, %v26
  %v28 = vrot.slane %v21, %v27
  %vm30 = vcmask 261120
  %v32 = vsel %vm30, %v22, 0
  %34 = vmatprep.subr.mxu0 0.0
  %35 = vmatpush1.msra.mxu0 %v17
  %36 = vmatprep.subr.mxu0 0.0
  %37 = vmatpush1.msra.mxu0 %v18
  %38 = vmatprep.subr.mxu0 0.0
  %39 = vmatpush1.msra.mxu0 %v19
  %40 = vmatprep.subr.mxu0 0.0
  %41 = vmatpush1.msra.mxu0 %v20
  %42 = vmatprep.subr.mxu0 0.0
  %43 = vmatpush1.msra.mxu0 0.0
  %44 = vmatprep.subr.mxu0 0.0
  %45 = vmatpush1.msra.mxu0 0.0
  %46 = vmatprep.subr.mxu0 0.0
  %47 = vmatpush1.msra.mxu0 0.0
  %48 = vmatprep.subr.mxu0 0.0
  %49 = vmatpush1.msra.mxu0 0.0
  %50 = vmatprep.subr.mxu0 0.0
  %51 = vmatpush1.msra.mxu0 0.0
  %52 = vmatprep.subr.mxu0 0.0
  %53 = vmatpush1.msra.mxu0 0.0
  %54 = vmatprep.subr.mxu0 0.0
  %55 = vmatpush1.msra.mxu0 0.0
  %56 = vmatprep.subr.mxu0 0.0
  %57 = vmatpush1.msra.mxu0 0.0
  %58 = vmatprep.subr.mxu0 0.0
  %59 = vmatpush1.msra.mxu0 0.0
  %60 = vmatprep.subr.mxu0 0.0
  %61 = vmatpush1.msra.mxu0 0.0
  %62 = vmatprep.subr.mxu0 0.0
  %63 = vmatpush1.msra.mxu0 0.0
  %64 = vmatprep.subr.mxu0 0.0
  %65 = vmatpush1.msra.mxu0 0.0
  %66 = vmatprep.subr.mxu0 0.0
  %67 = vmatpush1.msra.mxu0 0.0
  %68 = vmatprep.subr.mxu0 0.0
  %69 = vmatpush1.msra.mxu0 0.0
  %70 = vmatprep.subr.mxu0 0.0
  %71 = vmatpush1.msra.mxu0 0.0
  %72 = vmatprep.subr.mxu0 0.0
  %73 = vmatpush1.msra.mxu0 0.0
  %74 = vmatprep.subr.mxu0 0.0
  %75 = vmatpush1.msra.mxu0 0.0
  %76 = vmatprep.subr.mxu0 0.0
  %77 = vmatpush1.msra.mxu0 0.0
  %78 = vmatprep.subr.mxu0 0.0
  %79 = vmatpush1.msra.mxu0 0.0
  %80 = vmatprep.subr.mxu0 0.0
  %81 = vmatpush1.msra.mxu0 0.0
  %82 = vmatprep.subr.mxu0 0.0
  %83 = vmatpush1.msra.mxu0 0.0
  %84 = vmatprep.subr.mxu0 0.0
  %85 = vmatpush1.msra.mxu0 0.0
  %86 = vmatprep.subr.mxu0 0.0
  %87 = vmatpush1.msra.mxu0 0.0
  %88 = vmatprep.subr.mxu0 0.0
  %89 = vmatpush1.msra.mxu0 0.0
  %90 = vmatprep.subr.mxu0 0.0
  %91 = vmatpush1.msra.mxu0 0.0
  %92 = vmatprep.subr.mxu0 0.0
  %93 = vmatpush1.msra.mxu0 0.0
  %94 = vmatprep.subr.mxu0 0.0
  %95 = vmatpush1.msra.mxu0 0.0
  %96 = vmatprep.subr.mxu0 0.0
  %97 = vmatpush1.msra.mxu0 0.0
  %98 = vmatprep.mubr.f32.mxu0 0.0
  %99 = vmatmul.mubr.f32.gmra.mrb[0].mxu0 %v32
  %v100 = vpop.f32.mrb[0].mxu0
  %v101 = vadd.f32 %v28, %v100
  %v102 = vpop.f32.mrb[0].mxu0
  %103 = vdwg.mxu0
  %v104 = vadd.f32 %v23, %v101
  %v105 = vxor.u32 %v104, 2147483648
  %v106 = vmul.f32 %v105, 1.442695
  %v107 = vpow.pop %v106
  %v108 = vadd.f32 %v107, 1.0
  %v109 = vrcp.pop %v108
  %v110 = vmul.f32 1.0, %v109
  %112 = vrot.lane.b32.xlu0 %v101, 64
  %v113 = vpop.permute.xlu0 %112
  %v115 = vmul.f32 %v110, %v113
  %117 = vrot.lane.b32.xlu0 %v115, 64
  %v118 = vpop.permute.xlu0 %117
  %v120 = vadd.f32 %v23, %v118
  %v121 = vtanh.pop %v120
  %v122 = vsub.f32 1.0, %v110
  %124 = vrot.lane.b32.xlu0 %v121, 96
  %v125 = vpop.permute.xlu0 %124
  %v127 = vmul.f32 %v122, %v125
  %128 = vrot.lane.b32.xlu0 %v22, 32
  %v129 = vpop.permute.xlu0 %128
  %v131 = vmul.f32 %v110, %v129
  %v132 = vadd.f32 %v127, %v131
  %134 = vrot.lane.b32.xlu0 %v132, 96
  %v135 = vpop.permute.xlu0 %134
  %vm137 = vcmask 254976
  %138 = vst.msk [vmem:[%s4] sm:$0x3] %vm137, %v135
  %s139 = scalar_lea.vmem %s0, 2
  %v140 = vld [vmem:[%s139] sm:$0x3]
  %v141 = vsel %vm30, %v135, 0
  %143 = vmatprep.subr.mxu0 0.0
  %144 = vmatpush1.msra.mxu0 %v17
  %145 = vmatprep.subr.mxu0 0.0
  %146 = vmatpush1.msra.mxu0 %v18
  %147 = vmatprep.subr.mxu0 0.0
  %148 = vmatpush1.msra.mxu0 %v19
  %149 = vmatprep.subr.mxu0 0.0
  %150 = vmatpush1.msra.mxu0 %v20
  %151 = vmatprep.subr.mxu0 0.0
  %152 = vmatpush1.msra.mxu0 0.0
  %153 = vmatprep.subr.mxu0 0.0
  %154 = vmatpush1.msra.mxu0 0.0
  %155 = vmatprep.subr.mxu0 0.0
  %156 = vmatpush1.msra.mxu0 0.0
  %157 = vmatprep.subr.mxu0 0.0
  %158 = vmatpush1.msra.mxu0 0.0
  %159 = vmatprep.subr.mxu0 0.0
  %160 = vmatpush1.msra.mxu0 0.0
  %161 = vmatprep.subr.mxu0 0.0
  %162 = vmatpush1.msra.mxu0 0.0
  %163 = vmatprep.subr.mxu0 0.0
  %164 = vmatpush1.msra.mxu0 0.0
  %165 = vmatprep.subr.mxu0 0.0
  %166 = vmatpush1.msra.mxu0 0.0
  %167 = vmatprep.subr.mxu0 0.0
  %168 = vmatpush1.msra.mxu0 0.0
  %169 = vmatprep.subr.mxu0 0.0
  %170 = vmatpush1.msra.mxu0 0.0
  %171 = vmatprep.subr.mxu0 0.0
  %172 = vmatpush1.msra.mxu0 0.0
  %173 = vmatprep.subr.mxu0 0.0
  %174 = vmatpush1.msra.mxu0 0.0
  %175 = vmatprep.subr.mxu0 0.0
  %176 = vmatpush1.msra.mxu0 0.0
  %177 = vmatprep.subr.mxu0 0.0
  %178 = vmatpush1.msra.mxu0 0.0
  %179 = vmatprep.subr.mxu0 0.0
  %180 = vmatpush1.msra.mxu0 0.0
  %181 = vmatprep.subr.mxu0 0.0
  %182 = vmatpush1.msra.mxu0 0.0
  %183 = vmatprep.subr.mxu0 0.0
  %184 = vmatpush1.msra.mxu0 0.0
  %185 = vmatprep.subr.mxu0 0.0
  %186 = vmatpush1.msra.mxu0 0.0
  %187 = vmatprep.subr.mxu0 0.0
  %188 = vmatpush1.msra.mxu0 0.0
  %189 = vmatprep.subr.mxu0 0.0
  %190 = vmatpush1.msra.mxu0 0.0
  %191 = vmatprep.subr.mxu0 0.0
  %192 = vmatpush1.msra.mxu0 0.0
  %193 = vmatprep.subr.mxu0 0.0
  %194 = vmatpush1.msra.mxu0 0.0
  %195 = vmatprep.subr.mxu0 0.0
  %196 = vmatpush1.msra.mxu0 0.0
  %197 = vmatprep.subr.mxu0 0.0
  %198 = vmatpush1.msra.mxu0 0.0
  %199 = vmatprep.subr.mxu0 0.0
  %200 = vmatpush1.msra.mxu0 0.0
  %201 = vmatprep.subr.mxu0 0.0
  %202 = vmatpush1.msra.mxu0 0.0
  %203 = vmatprep.subr.mxu0 0.0
  %204 = vmatpush1.msra.mxu0 0.0
  %205 = vmatprep.subr.mxu0 0.0
  %206 = vmatpush1.msra.mxu0 0.0
  %207 = vmatprep.mubr.f32.mxu0 0.0
  %208 = vmatmul.mubr.f32.gmra.mrb[0].mxu0 %v141
  %v209 = vpop.f32.mrb[0].mxu0
  %v210 = vadd.f32 %v28, %v209
  %v211 = vpop.f32.mrb[0].mxu0
  %212 = vdwg.mxu0
  %v213 = vadd.f32 %v140, %v210
  %v214 = vxor.u32 %v213, 2147483648
  %v215 = vmul.f32 %v214, 1.442695
  %v216 = vpow.pop %v215
  %v217 = vadd.f32 %v216, 1.0
  %v218 = vrcp.pop %v217
  %v219 = vmul.f32 1.0, %v218
  %221 = vrot.lane.b32.xlu0 %v210, 64
  %v222 = vpop.permute.xlu0 %221
  %v224 = vmul.f32 %v219, %v222
  %226 = vrot.lane.b32.xlu0 %v224, 64
  %v227 = vpop.permute.xlu0 %226
  %v229 = vadd.f32 %v140, %v227
  %v230 = vtanh.pop %v229
  %v231 = vsub.f32 1.0, %v219
  %233 = vrot.lane.b32.xlu0 %v230, 96
  %v234 = vpop.permute.xlu0 %233
  %v236 = vmul.f32 %v231, %v234
  %v237 = vmul.f32 %v219, %v132
  %v238 = vadd.f32 %v236, %v237
  %240 = vrot.lane.b32.xlu0 %v238, 96
  %v241 = vpop.permute.xlu0 %240
  %s243 = scalar_lea.vmem %s4, 2
  %244 = vst.msk [vmem:[%s243] sm:$0x3] %vm137, %v241
  %s245 = scalar_lea.vmem %s0, 4
  %v246 = vld [vmem:[%s245] sm:$0x3]
  %v247 = vsel %vm30, %v241, 0
  %249 = vmatprep.subr.mxu0 0.0
  %250 = vmatpush1.msra.mxu0 %v17
  %251 = vmatprep.subr.mxu0 0.0
  %252 = vmatpush1.msra.mxu0 %v18
  %253 = vmatprep.subr.mxu0 0.0
  %254 = vmatpush1.msra.mxu0 %v19
  %255 = vmatprep.subr.mxu0 0.0
  %256 = vmatpush1.msra.mxu0 %v20
  %257 = vmatprep.subr.mxu0 0.0
  %258 = vmatpush1.msra.mxu0 0.0
  %259 = vmatprep.subr.mxu0 0.0
  %260 = vmatpush1.msra.mxu0 0.0
  %261 = vmatprep.subr.mxu0 0.0
  %262 = vmatpush1.msra.mxu0 0.0
  %263 = vmatprep.subr.mxu0 0.0
  %264 = vmatpush1.msra.mxu0 0.0
  %265 = vmatprep.subr.mxu0 0.0
  %266 = vmatpush1.msra.mxu0 0.0
  %267 = vmatprep.subr.mxu0 0.0
  %268 = vmatpush1.msra.mxu0 0.0
  %269 = vmatprep.subr.mxu0 0.0
  %270 = vmatpush1.msra.mxu0 0.0
  %271 = vmatprep.subr.mxu0 0.0
  %272 = vmatpush1.msra.mxu0 0.0
  %273 = vmatprep.subr.mxu0 0.0
  %274 = vmatpush1.msra.mxu0 0.0
  %275 = vmatprep.subr.mxu0 0.0
  %276 = vmatpush1.msra.mxu0 0.0
  %277 = vmatprep.subr.mxu0 0.0
  %278 = vmatpush1.msra.mxu0 0.0
  %279 = vmatprep.subr.mxu0 0.0
  %280 = vmatpush1.msra.mxu0 0.0
  %281 = vmatprep.subr.mxu0 0.0
  %282 = vmatpush1.msra.mxu0 0.0
  %283 = vmatprep.subr.mxu0 0.0
  %284 = vmatpush1.msra.mxu0 0.0
  %285 = vmatprep.subr.mxu0 0.0
  %286 = vmatpush1.msra.mxu0 0.0
  %287 = vmatprep.subr.mxu0 0.0
  %288 = vmatpush1.msra.mxu0 0.0
  %289 = vmatprep.subr.mxu0 0.0
  %290 = vmatpush1.msra.mxu0 0.0
  %291 = vmatprep.subr.mxu0 0.0
  %292 = vmatpush1.msra.mxu0 0.0
  %293 = vmatprep.subr.mxu0 0.0
  %294 = vmatpush1.msra.mxu0 0.0
  %295 = vmatprep.subr.mxu0 0.0
  %296 = vmatpush1.msra.mxu0 0.0
  %297 = vmatprep.subr.mxu0 0.0
  %298 = vmatpush1.msra.mxu0 0.0
  %299 = vmatprep.subr.mxu0 0.0
  %300 = vmatpush1.msra.mxu0 0.0
  %301 = vmatprep.subr.mxu0 0.0
  %302 = vmatpush1.msra.mxu0 0.0
  %303 = vmatprep.subr.mxu0 0.0
  %304 = vmatpush1.msra.mxu0 0.0
  %305 = vmatprep.subr.mxu0 0.0
  %306 = vmatpush1.msra.mxu0 0.0
  %307 = vmatprep.subr.mxu0 0.0
  %308 = vmatpush1.msra.mxu0 0.0
  %309 = vmatprep.subr.mxu0 0.0
  %310 = vmatpush1.msra.mxu0 0.0
  %311 = vmatprep.subr.mxu0 0.0
  %312 = vmatpush1.msra.mxu0 0.0
  %313 = vmatprep.mubr.f32.mxu0 0.0
  %314 = vmatmul.mubr.f32.gmra.mrb[0].mxu0 %v247
  %v315 = vpop.f32.mrb[0].mxu0
  %v316 = vadd.f32 %v28, %v315
  %v317 = vpop.f32.mrb[0].mxu0
  %318 = vdwg.mxu0
  %v319 = vadd.f32 %v246, %v316
  %v320 = vxor.u32 %v319, 2147483648
  %v321 = vmul.f32 %v320, 1.442695
  %v322 = vpow.pop %v321
  %v323 = vadd.f32 %v322, 1.0
  %v324 = vrcp.pop %v323
  %v325 = vmul.f32 1.0, %v324
  %327 = vrot.lane.b32.xlu0 %v316, 64
  %v328 = vpop.permute.xlu0 %327
  %v330 = vmul.f32 %v325, %v328
  %332 = vrot.lane.b32.xlu0 %v330, 64
  %v333 = vpop.permute.xlu0 %332
  %v335 = vadd.f32 %v246, %v333
  %v336 = vtanh.pop %v335
  %v337 = vsub.f32 1.0, %v325
  %339 = vrot.lane.b32.xlu0 %v336, 96
  %v340 = vpop.permute.xlu0 %339
  %v342 = vmul.f32 %v337, %v340
  %v343 = vmul.f32 %v325, %v238
  %v344 = vadd.f32 %v342, %v343
  %346 = vrot.lane.b32.xlu0 %v344, 96
  %v347 = vpop.permute.xlu0 %346
  %s349 = scalar_lea.vmem %s4, 4
  %350 = vst.msk [vmem:[%s349] sm:$0x3] %vm137, %v347
  %s351 = scalar_lea.vmem %s0, 6
  %v352 = vld [vmem:[%s351] sm:$0x3]
  %v353 = vsel %vm30, %v347, 0
  %355 = vmatprep.subr.mxu0 0.0
  %356 = vmatpush1.msra.mxu0 %v17
  %357 = vmatprep.subr.mxu0 0.0
  %358 = vmatpush1.msra.mxu0 %v18
  %359 = vmatprep.subr.mxu0 0.0
  %360 = vmatpush1.msra.mxu0 %v19
  %361 = vmatprep.subr.mxu0 0.0
  %362 = vmatpush1.msra.mxu0 %v20
  %363 = vmatprep.subr.mxu0 0.0
  %364 = vmatpush1.msra.mxu0 0.0
  %365 = vmatprep.subr.mxu0 0.0
  %366 = vmatpush1.msra.mxu0 0.0
  %367 = vmatprep.subr.mxu0 0.0
  %368 = vmatpush1.msra.mxu0 0.0
  %369 = vmatprep.subr.mxu0 0.0
  %370 = vmatpush1.msra.mxu0 0.0
  %371 = vmatprep.subr.mxu0 0.0
  %372 = vmatpush1.msra.mxu0 0.0
  %373 = vmatprep.subr.mxu0 0.0
  %374 = vmatpush1.msra.mxu0 0.0
  %375 = vmatprep.subr.mxu0 0.0
  %376 = vmatpush1.msra.mxu0 0.0
  %377 = vmatprep.subr.mxu0 0.0
  %378 = vmatpush1.msra.mxu0 0.0
  %379 = vmatprep.subr.mxu0 0.0
  %380 = vmatpush1.msra.mxu0 0.0
  %381 = vmatprep.subr.mxu0 0.0
  %382 = vmatpush1.msra.mxu0 0.0
  %383 = vmatprep.subr.mxu0 0.0
  %384 = vmatpush1.msra.mxu0 0.0
  %385 = vmatprep.subr.mxu0 0.0
  %386 = vmatpush1.msra.mxu0 0.0
  %387 = vmatprep.subr.mxu0 0.0
  %388 = vmatpush1.msra.mxu0 0.0
  %389 = vmatprep.subr.mxu0 0.0
  %390 = vmatpush1.msra.mxu0 0.0
  %391 = vmatprep.subr.mxu0 0.0
  %392 = vmatpush1.msra.mxu0 0.0
  %393 = vmatprep.subr.mxu0 0.0
  %394 = vmatpush1.msra.mxu0 0.0
  %395 = vmatprep.subr.mxu0 0.0
  %396 = vmatpush1.msra.mxu0 0.0
  %397 = vmatprep.subr.mxu0 0.0
  %398 = vmatpush1.msra.mxu0 0.0
  %399 = vmatprep.subr.mxu0 0.0
  %400 = vmatpush1.msra.mxu0 0.0
  %401 = vmatprep.subr.mxu0 0.0
  %402 = vmatpush1.msra.mxu0 0.0
  %403 = vmatprep.subr.mxu0 0.0
  %404 = vmatpush1.msra.mxu0 0.0
  %405 = vmatprep.subr.mxu0 0.0
  %406 = vmatpush1.msra.mxu0 0.0
  %407 = vmatprep.subr.mxu0 0.0
  %408 = vmatpush1.msra.mxu0 0.0
  %409 = vmatprep.subr.mxu0 0.0
  %410 = vmatpush1.msra.mxu0 0.0
  %411 = vmatprep.subr.mxu0 0.0
  %412 = vmatpush1.msra.mxu0 0.0
  %413 = vmatprep.subr.mxu0 0.0
  %414 = vmatpush1.msra.mxu0 0.0
  %415 = vmatprep.subr.mxu0 0.0
  %416 = vmatpush1.msra.mxu0 0.0
  %417 = vmatprep.subr.mxu0 0.0
  %418 = vmatpush1.msra.mxu0 0.0
  %419 = vmatprep.mubr.f32.mxu0 0.0
  %420 = vmatmul.mubr.f32.gmra.mrb[0].mxu0 %v353
  %v421 = vpop.f32.mrb[0].mxu0
  %v422 = vadd.f32 %v28, %v421
  %v423 = vpop.f32.mrb[0].mxu0
  %424 = vdwg.mxu0
  %v425 = vadd.f32 %v352, %v422
  %v426 = vxor.u32 %v425, 2147483648
  %v427 = vmul.f32 %v426, 1.442695
  %v428 = vpow.pop %v427
  %v429 = vadd.f32 %v428, 1.0
  %v430 = vrcp.pop %v429
  %v431 = vmul.f32 1.0, %v430
  %433 = vrot.lane.b32.xlu0 %v422, 64
  %v434 = vpop.permute.xlu0 %433
  %v436 = vmul.f32 %v431, %v434
  %438 = vrot.lane.b32.xlu0 %v436, 64
  %v439 = vpop.permute.xlu0 %438
  %v441 = vadd.f32 %v352, %v439
  %v442 = vtanh.pop %v441
  %v443 = vsub.f32 1.0, %v431
  %445 = vrot.lane.b32.xlu0 %v442, 96
  %v446 = vpop.permute.xlu0 %445
  %v448 = vmul.f32 %v443, %v446
  %v449 = vmul.f32 %v431, %v344
  %v450 = vadd.f32 %v448, %v449
  %452 = vrot.lane.b32.xlu0 %v450, 96
  %v453 = vpop.permute.xlu0 %452
  %s455 = scalar_lea.vmem %s4, 6
  %456 = vst.msk [vmem:[%s455] sm:$0x3] %vm137, %v453
  %s457 = scalar_lea.vmem %s0, 8
  %v458 = vld [vmem:[%s457] sm:$0x3]
  %v459 = vsel %vm30, %v453, 0
  %461 = vmatprep.subr.mxu0 0.0
  %462 = vmatpush1.msra.mxu0 %v17
  %463 = vmatprep.subr.mxu0 0.0
  %464 = vmatpush1.msra.mxu0 %v18
  %465 = vmatprep.subr.mxu0 0.0
  %466 = vmatpush1.msra.mxu0 %v19
  %467 = vmatprep.subr.mxu0 0.0
  %468 = vmatpush1.msra.mxu0 %v20
  %469 = vmatprep.subr.mxu0 0.0
  %470 = vmatpush1.msra.mxu0 0.0
  %471 = vmatprep.subr.mxu0 0.0
  %472 = vmatpush1.msra.mxu0 0.0
  %473 = vmatprep.subr.mxu0 0.0
  %474 = vmatpush1.msra.mxu0 0.0
  %475 = vmatprep.subr.mxu0 0.0
  %476 = vmatpush1.msra.mxu0 0.0
  %477 = vmatprep.subr.mxu0 0.0
  %478 = vmatpush1.msra.mxu0 0.0
  %479 = vmatprep.subr.mxu0 0.0
  %480 = vmatpush1.msra.mxu0 0.0
  %481 = vmatprep.subr.mxu0 0.0
  %482 = vmatpush1.msra.mxu0 0.0
  %483 = vmatprep.subr.mxu0 0.0
  %484 = vmatpush1.msra.mxu0 0.0
  %485 = vmatprep.subr.mxu0 0.0
  %486 = vmatpush1.msra.mxu0 0.0
  %487 = vmatprep.subr.mxu0 0.0
  %488 = vmatpush1.msra.mxu0 0.0
  %489 = vmatprep.subr.mxu0 0.0
  %490 = vmatpush1.msra.mxu0 0.0
  %491 = vmatprep.subr.mxu0 0.0
  %492 = vmatpush1.msra.mxu0 0.0
  %493 = vmatprep.subr.mxu0 0.0
  %494 = vmatpush1.msra.mxu0 0.0
  %495 = vmatprep.subr.mxu0 0.0
  %496 = vmatpush1.msra.mxu0 0.0
  %497 = vmatprep.subr.mxu0 0.0
  %498 = vmatpush1.msra.mxu0 0.0
  %499 = vmatprep.subr.mxu0 0.0
  %500 = vmatpush1.msra.mxu0 0.0
  %501 = vmatprep.subr.mxu0 0.0
  %502 = vmatpush1.msra.mxu0 0.0
  %503 = vmatprep.subr.mxu0 0.0
  %504 = vmatpush1.msra.mxu0 0.0
  %505 = vmatprep.subr.mxu0 0.0
  %506 = vmatpush1.msra.mxu0 0.0
  %507 = vmatprep.subr.mxu0 0.0
  %508 = vmatpush1.msra.mxu0 0.0
  %509 = vmatprep.subr.mxu0 0.0
  %510 = vmatpush1.msra.mxu0 0.0
  %511 = vmatprep.subr.mxu0 0.0
  %512 = vmatpush1.msra.mxu0 0.0
  %513 = vmatprep.subr.mxu0 0.0
  %514 = vmatpush1.msra.mxu0 0.0
  %515 = vmatprep.subr.mxu0 0.0
  %516 = vmatpush1.msra.mxu0 0.0
  %517 = vmatprep.subr.mxu0 0.0
  %518 = vmatpush1.msra.mxu0 0.0
  %519 = vmatprep.subr.mxu0 0.0
  %520 = vmatpush1.msra.mxu0 0.0
  %521 = vmatprep.subr.mxu0 0.0
  %522 = vmatpush1.msra.mxu0 0.0
  %523 = vmatprep.subr.mxu0 0.0
  %524 = vmatpush1.msra.mxu0 0.0
  %525 = vmatprep.mubr.f32.mxu0 0.0
  %526 = vmatmul.mubr.f32.gmra.mrb[0].mxu0 %v459
  %v527 = vpop.f32.mrb[0].mxu0
  %v528 = vadd.f32 %v28, %v527
  %v529 = vpop.f32.mrb[0].mxu0
  %530 = vdwg.mxu0
  %v531 = vadd.f32 %v458, %v528
  %v532 = vxor.u32 %v531, 2147483648
  %v533 = vmul.f32 %v532, 1.442695
  %v534 = vpow.pop %v533
  %v535 = vadd.f32 %v534, 1.0
  %v536 = vrcp.pop %v535
  %v537 = vmul.f32 1.0, %v536
  %539 = vrot.lane.b32.xlu0 %v528, 64
  %v540 = vpop.permute.xlu0 %539
  %v542 = vmul.f32 %v537, %v540
  %544 = vrot.lane.b32.xlu0 %v542, 64
  %v545 = vpop.permute.xlu0 %544
  %v547 = vadd.f32 %v458, %v545
  %v548 = vtanh.pop %v547
  %v549 = vsub.f32 1.0, %v537
  %551 = vrot.lane.b32.xlu0 %v548, 96
  %v552 = vpop.permute.xlu0 %551
  %v554 = vmul.f32 %v549, %v552
  %v555 = vmul.f32 %v537, %v450
  %v556 = vadd.f32 %v554, %v555
  %558 = vrot.lane.b32.xlu0 %v556, 96
  %v559 = vpop.permute.xlu0 %558
  %s561 = scalar_lea.vmem %s4, 8
  %562 = vst.msk [vmem:[%s561] sm:$0x3] %vm137, %v559
  %s563 = scalar_lea.vmem %s0, 10
  %v564 = vld [vmem:[%s563] sm:$0x3]
  %v565 = vsel %vm30, %v559, 0
  %567 = vmatprep.subr.mxu0 0.0
  %568 = vmatpush1.msra.mxu0 %v17
  %569 = vmatprep.subr.mxu0 0.0
  %570 = vmatpush1.msra.mxu0 %v18
  %571 = vmatprep.subr.mxu0 0.0
  %572 = vmatpush1.msra.mxu0 %v19
  %573 = vmatprep.subr.mxu0 0.0
  %574 = vmatpush1.msra.mxu0 %v20
  %575 = vmatprep.subr.mxu0 0.0
  %576 = vmatpush1.msra.mxu0 0.0
  %577 = vmatprep.subr.mxu0 0.0
  %578 = vmatpush1.msra.mxu0 0.0
  %579 = vmatprep.subr.mxu0 0.0
  %580 = vmatpush1.msra.mxu0 0.0
  %581 = vmatprep.subr.mxu0 0.0
  %582 = vmatpush1.msra.mxu0 0.0
  %583 = vmatprep.subr.mxu0 0.0
  %584 = vmatpush1.msra.mxu0 0.0
  %585 = vmatprep.subr.mxu0 0.0
  %586 = vmatpush1.msra.mxu0 0.0
  %587 = vmatprep.subr.mxu0 0.0
  %588 = vmatpush1.msra.mxu0 0.0
  %589 = vmatprep.subr.mxu0 0.0
  %590 = vmatpush1.msra.mxu0 0.0
  %591 = vmatprep.subr.mxu0 0.0
  %592 = vmatpush1.msra.mxu0 0.0
  %593 = vmatprep.subr.mxu0 0.0
  %594 = vmatpush1.msra.mxu0 0.0
  %595 = vmatprep.subr.mxu0 0.0
  %596 = vmatpush1.msra.mxu0 0.0
  %597 = vmatprep.subr.mxu0 0.0
  %598 = vmatpush1.msra.mxu0 0.0
  %599 = vmatprep.subr.mxu0 0.0
  %600 = vmatpush1.msra.mxu0 0.0
  %601 = vmatprep.subr.mxu0 0.0
  %602 = vmatpush1.msra.mxu0 0.0
  %603 = vmatprep.subr.mxu0 0.0
  %604 = vmatpush1.msra.mxu0 0.0
  %605 = vmatprep.subr.mxu0 0.0
  %606 = vmatpush1.msra.mxu0 0.0
  %607 = vmatprep.subr.mxu0 0.0
  %608 = vmatpush1.msra.mxu0 0.0
  %609 = vmatprep.subr.mxu0 0.0
  %610 = vmatpush1.msra.mxu0 0.0
  %611 = vmatprep.subr.mxu0 0.0
  %612 = vmatpush1.msra.mxu0 0.0
  %613 = vmatprep.subr.mxu0 0.0
  %614 = vmatpush1.msra.mxu0 0.0
  %615 = vmatprep.subr.mxu0 0.0
  %616 = vmatpush1.msra.mxu0 0.0
  %617 = vmatprep.subr.mxu0 0.0
  %618 = vmatpush1.msra.mxu0 0.0
  %619 = vmatprep.subr.mxu0 0.0
  %620 = vmatpush1.msra.mxu0 0.0
  %621 = vmatprep.subr.mxu0 0.0
  %622 = vmatpush1.msra.mxu0 0.0
  %623 = vmatprep.subr.mxu0 0.0
  %624 = vmatpush1.msra.mxu0 0.0
  %625 = vmatprep.subr.mxu0 0.0
  %626 = vmatpush1.msra.mxu0 0.0
  %627 = vmatprep.subr.mxu0 0.0
  %628 = vmatpush1.msra.mxu0 0.0
  %629 = vmatprep.subr.mxu0 0.0
  %630 = vmatpush1.msra.mxu0 0.0
  %631 = vmatprep.mubr.f32.mxu0 0.0
  %632 = vmatmul.mubr.f32.gmra.mrb[0].mxu0 %v565
  %v633 = vpop.f32.mrb[0].mxu0
  %v634 = vadd.f32 %v28, %v633
  %v635 = vpop.f32.mrb[0].mxu0
  %636 = vdwg.mxu0
  %v637 = vadd.f32 %v564, %v634
  %v638 = vxor.u32 %v637, 2147483648
  %v639 = vmul.f32 %v638, 1.442695
  %v640 = vpow.pop %v639
  %v641 = vadd.f32 %v640, 1.0
  %v642 = vrcp.pop %v641
  %v643 = vmul.f32 1.0, %v642
  %645 = vrot.lane.b32.xlu0 %v634, 64
  %v646 = vpop.permute.xlu0 %645
  %v648 = vmul.f32 %v643, %v646
  %650 = vrot.lane.b32.xlu0 %v648, 64
  %v651 = vpop.permute.xlu0 %650
  %v653 = vadd.f32 %v564, %v651
  %v654 = vtanh.pop %v653
  %v655 = vsub.f32 1.0, %v643
  %657 = vrot.lane.b32.xlu0 %v654, 96
  %v658 = vpop.permute.xlu0 %657
  %v660 = vmul.f32 %v655, %v658
  %v661 = vmul.f32 %v643, %v556
  %v662 = vadd.f32 %v660, %v661
  %664 = vrot.lane.b32.xlu0 %v662, 96
  %v665 = vpop.permute.xlu0 %664
  %s667 = scalar_lea.vmem %s4, 10
  %668 = vst.msk [vmem:[%s667] sm:$0x3] %vm137, %v665
  %s669 = scalar_lea.vmem %s0, 12
  %v670 = vld [vmem:[%s669] sm:$0x3]
  %v671 = vsel %vm30, %v665, 0
  %673 = vmatprep.subr.mxu0 0.0
  %674 = vmatpush1.msra.mxu0 %v17
  %675 = vmatprep.subr.mxu0 0.0
  %676 = vmatpush1.msra.mxu0 %v18
  %677 = vmatprep.subr.mxu0 0.0
  %678 = vmatpush1.msra.mxu0 %v19
  %679 = vmatprep.subr.mxu0 0.0
  %680 = vmatpush1.msra.mxu0 %v20
  %681 = vmatprep.subr.mxu0 0.0
  %682 = vmatpush1.msra.mxu0 0.0
  %683 = vmatprep.subr.mxu0 0.0
  %684 = vmatpush1.msra.mxu0 0.0
  %685 = vmatprep.subr.mxu0 0.0
  %686 = vmatpush1.msra.mxu0 0.0
  %687 = vmatprep.subr.mxu0 0.0
  %688 = vmatpush1.msra.mxu0 0.0
  %689 = vmatprep.subr.mxu0 0.0
  %690 = vmatpush1.msra.mxu0 0.0
  %691 = vmatprep.subr.mxu0 0.0
  %692 = vmatpush1.msra.mxu0 0.0
  %693 = vmatprep.subr.mxu0 0.0
  %694 = vmatpush1.msra.mxu0 0.0
  %695 = vmatprep.subr.mxu0 0.0
  %696 = vmatpush1.msra.mxu0 0.0
  %697 = vmatprep.subr.mxu0 0.0
  %698 = vmatpush1.msra.mxu0 0.0
  %699 = vmatprep.subr.mxu0 0.0
  %700 = vmatpush1.msra.mxu0 0.0
  %701 = vmatprep.subr.mxu0 0.0
  %702 = vmatpush1.msra.mxu0 0.0
  %703 = vmatprep.subr.mxu0 0.0
  %704 = vmatpush1.msra.mxu0 0.0
  %705 = vmatprep.subr.mxu0 0.0
  %706 = vmatpush1.msra.mxu0 0.0
  %707 = vmatprep.subr.mxu0 0.0
  %708 = vmatpush1.msra.mxu0 0.0
  %709 = vmatprep.subr.mxu0 0.0
  %710 = vmatpush1.msra.mxu0 0.0
  %711 = vmatprep.subr.mxu0 0.0
  %712 = vmatpush1.msra.mxu0 0.0
  %713 = vmatprep.subr.mxu0 0.0
  %714 = vmatpush1.msra.mxu0 0.0
  %715 = vmatprep.subr.mxu0 0.0
  %716 = vmatpush1.msra.mxu0 0.0
  %717 = vmatprep.subr.mxu0 0.0
  %718 = vmatpush1.msra.mxu0 0.0
  %719 = vmatprep.subr.mxu0 0.0
  %720 = vmatpush1.msra.mxu0 0.0
  %721 = vmatprep.subr.mxu0 0.0
  %722 = vmatpush1.msra.mxu0 0.0
  %723 = vmatprep.subr.mxu0 0.0
  %724 = vmatpush1.msra.mxu0 0.0
  %725 = vmatprep.subr.mxu0 0.0
  %726 = vmatpush1.msra.mxu0 0.0
  %727 = vmatprep.subr.mxu0 0.0
  %728 = vmatpush1.msra.mxu0 0.0
  %729 = vmatprep.subr.mxu0 0.0
  %730 = vmatpush1.msra.mxu0 0.0
  %731 = vmatprep.subr.mxu0 0.0
  %732 = vmatpush1.msra.mxu0 0.0
  %733 = vmatprep.subr.mxu0 0.0
  %734 = vmatpush1.msra.mxu0 0.0
  %735 = vmatprep.subr.mxu0 0.0
  %736 = vmatpush1.msra.mxu0 0.0
  %737 = vmatprep.mubr.f32.mxu0 0.0
  %738 = vmatmul.mubr.f32.gmra.mrb[0].mxu0 %v671
  %v739 = vpop.f32.mrb[0].mxu0
  %v740 = vadd.f32 %v28, %v739
  %v741 = vpop.f32.mrb[0].mxu0
  %742 = vdwg.mxu0
  %v743 = vadd.f32 %v670, %v740
  %v744 = vxor.u32 %v743, 2147483648
  %v745 = vmul.f32 %v744, 1.442695
  %v746 = vpow.pop %v745
  %v747 = vadd.f32 %v746, 1.0
  %v748 = vrcp.pop %v747
  %v749 = vmul.f32 1.0, %v748
  %751 = vrot.lane.b32.xlu0 %v740, 64
  %v752 = vpop.permute.xlu0 %751
  %v754 = vmul.f32 %v749, %v752
  %756 = vrot.lane.b32.xlu0 %v754, 64
  %v757 = vpop.permute.xlu0 %756
  %v759 = vadd.f32 %v670, %v757
  %v760 = vtanh.pop %v759
  %v761 = vsub.f32 1.0, %v749
  %763 = vrot.lane.b32.xlu0 %v760, 96
  %v764 = vpop.permute.xlu0 %763
  %v766 = vmul.f32 %v761, %v764
  %v767 = vmul.f32 %v749, %v662
  %v768 = vadd.f32 %v766, %v767
  %770 = vrot.lane.b32.xlu0 %v768, 96
  %v771 = vpop.permute.xlu0 %770
  %s773 = scalar_lea.vmem %s4, 12
  %774 = vst.msk [vmem:[%s773] sm:$0x3] %vm137, %v771
  %s775 = scalar_lea.vmem %s0, 14
  %v776 = vld [vmem:[%s775] sm:$0x3]
  %v777 = vsel %vm30, %v771, 0
  %779 = vmatprep.subr.mxu0 0.0
  %780 = vmatpush1.msra.mxu0 %v17
  %781 = vmatprep.subr.mxu0 0.0
  %782 = vmatpush1.msra.mxu0 %v18
  %783 = vmatprep.subr.mxu0 0.0
  %784 = vmatpush1.msra.mxu0 %v19
  %785 = vmatprep.subr.mxu0 0.0
  %786 = vmatpush1.msra.mxu0 %v20
  %787 = vmatprep.subr.mxu0 0.0
  %788 = vmatpush1.msra.mxu0 0.0
  %789 = vmatprep.subr.mxu0 0.0
  %790 = vmatpush1.msra.mxu0 0.0
  %791 = vmatprep.subr.mxu0 0.0
  %792 = vmatpush1.msra.mxu0 0.0
  %793 = vmatprep.subr.mxu0 0.0
  %794 = vmatpush1.msra.mxu0 0.0
  %795 = vmatprep.subr.mxu0 0.0
  %796 = vmatpush1.msra.mxu0 0.0
  %797 = vmatprep.subr.mxu0 0.0
  %798 = vmatpush1.msra.mxu0 0.0
  %799 = vmatprep.subr.mxu0 0.0
  %800 = vmatpush1.msra.mxu0 0.0
  %801 = vmatprep.subr.mxu0 0.0
  %802 = vmatpush1.msra.mxu0 0.0
  %803 = vmatprep.subr.mxu0 0.0
  %804 = vmatpush1.msra.mxu0 0.0
  %805 = vmatprep.subr.mxu0 0.0
  %806 = vmatpush1.msra.mxu0 0.0
  %807 = vmatprep.subr.mxu0 0.0
  %808 = vmatpush1.msra.mxu0 0.0
  %809 = vmatprep.subr.mxu0 0.0
  %810 = vmatpush1.msra.mxu0 0.0
  %811 = vmatprep.subr.mxu0 0.0
  %812 = vmatpush1.msra.mxu0 0.0
  %813 = vmatprep.subr.mxu0 0.0
  %814 = vmatpush1.msra.mxu0 0.0
  %815 = vmatprep.subr.mxu0 0.0
  %816 = vmatpush1.msra.mxu0 0.0
  %817 = vmatprep.subr.mxu0 0.0
  %818 = vmatpush1.msra.mxu0 0.0
  %819 = vmatprep.subr.mxu0 0.0
  %820 = vmatpush1.msra.mxu0 0.0
  %821 = vmatprep.subr.mxu0 0.0
  %822 = vmatpush1.msra.mxu0 0.0
  %823 = vmatprep.subr.mxu0 0.0
  %824 = vmatpush1.msra.mxu0 0.0
  %825 = vmatprep.subr.mxu0 0.0
  %826 = vmatpush1.msra.mxu0 0.0
  %827 = vmatprep.subr.mxu0 0.0
  %828 = vmatpush1.msra.mxu0 0.0
  %829 = vmatprep.subr.mxu0 0.0
  %830 = vmatpush1.msra.mxu0 0.0
  %831 = vmatprep.subr.mxu0 0.0
  %832 = vmatpush1.msra.mxu0 0.0
  %833 = vmatprep.subr.mxu0 0.0
  %834 = vmatpush1.msra.mxu0 0.0
  %835 = vmatprep.subr.mxu0 0.0
  %836 = vmatpush1.msra.mxu0 0.0
  %837 = vmatprep.subr.mxu0 0.0
  %838 = vmatpush1.msra.mxu0 0.0
  %839 = vmatprep.subr.mxu0 0.0
  %840 = vmatpush1.msra.mxu0 0.0
  %841 = vmatprep.subr.mxu0 0.0
  %842 = vmatpush1.msra.mxu0 0.0
  %843 = vmatprep.mubr.f32.mxu0 0.0
  %844 = vmatmul.mubr.f32.gmra.mrb[0].mxu0 %v777
  %v845 = vpop.f32.mrb[0].mxu0
  %v846 = vadd.f32 %v28, %v845
  %v847 = vpop.f32.mrb[0].mxu0
  %848 = vdwg.mxu0
  %v849 = vadd.f32 %v776, %v846
  %v850 = vxor.u32 %v849, 2147483648
  %v851 = vmul.f32 %v850, 1.442695
  %v852 = vpow.pop %v851
  %v853 = vadd.f32 %v852, 1.0
  %v854 = vrcp.pop %v853
  %v855 = vmul.f32 1.0, %v854
  %857 = vrot.lane.b32.xlu0 %v846, 64
  %v858 = vpop.permute.xlu0 %857
  %v860 = vmul.f32 %v855, %v858
  %862 = vrot.lane.b32.xlu0 %v860, 64
  %v863 = vpop.permute.xlu0 %862
  %v865 = vadd.f32 %v776, %v863
  %v866 = vtanh.pop %v865
  %v867 = vsub.f32 1.0, %v855
  %869 = vrot.lane.b32.xlu0 %v866, 96
  %v870 = vpop.permute.xlu0 %869
  %v872 = vmul.f32 %v867, %v870
  %v873 = vmul.f32 %v855, %v768
  %v874 = vadd.f32 %v872, %v873
  %876 = vrot.lane.b32.xlu0 %v874, 96
  %v877 = vpop.permute.xlu0 %876
  %s879 = scalar_lea.vmem %s4, 14
  %880 = vst.msk [vmem:[%s879] sm:$0x3] %vm137, %v877
  // Predicated region
  $region18: #{encoder_forward.1} parent=0 // pred_check
    _
  $region19: #{encoder_forward.1} parent=0 // pred_check_branch
    %882 = sbr.rel (0) target = $region21
  $region20: #{encoder_forward.1} parent=0 // pred_region
    _
  $region21: #{encoder_forward.1} parent=0 // pred_fallthru
    _
  // Predicated region
  $region22: #{encoder_forward.1} parent=0 // pred_check
    _
  $region23: #{encoder_forward.1} parent=0 // pred_check_branch
    %884 = sbr.rel (0) target = $region25
  $region24: #{encoder_forward.1} parent=0 // pred_region
    _
  $region25: #{encoder_forward.1} parent=0 // pred_fallthru
    _

</llo_original>
